<compile_context>
chip_gen: v5e
topology: v5e:2x2
jax: 0.10.0
libtpu: 0.0.40
codegen_flags: <defaults>
</compile_context>

<pallas_src>
import functools

import jax
import jax.numpy as jnp
from jax.experimental import pallas as pl
from jax.experimental.pallas import tpu as pltpu


def _conv3x3_bn_gelu_kernel(x_ref, w_ref, b_ref, o_ref, col_ref, *,
                            Wp, q_chunk, precision):
    """Fused 3x3 conv + folded-BN bias + exact GELU for one (batch, C_out tile).

    x_ref:   (1, C_in, P)     zero-padded input, spatial flattened row-major
                              over (H+3, Wp), Wp = W + 2 (top 1, bottom 2,
                              left/right 1).
    w_ref:   (TCO, 9*C_in)    BN-folded conv weights, rows ordered (ky, kx, ci).
    b_ref:   (TCO, 1)         BN-folded bias (f32).
    o_ref:   (1, TCO, Q)      Q = H * Wp (2 garbage cols/row, cropped outside).
    col_ref: (9*C_in, q_chunk) VMEM im2col scratch for one lane chunk.
    """
    C_in = x_ref.shape[1]
    Q = o_ref.shape[2]
    inv_sqrt2 = jnp.float32(0.7071067811865476)

    w = w_ref[...]        # (TCO, 9*C_in), input dtype (no up-cast before MXU)
    b = b_ref[...]        # (TCO, 1) f32

    for q0 in range(0, Q, q_chunk):          # static unrolled chunk loop
        qc = min(q_chunk, Q - q0)
        # ---- im2col for this chunk: K rows ordered (ky, kx, ci). ----
        for ky in range(3):
            for kx in range(3):
                t = ky * 3 + kx
                col_ref[pl.ds(t * C_in, C_in), pl.ds(0, qc)] = (
                    x_ref[0, :, pl.ds(q0 + ky * Wp + kx, qc)])
        # ---- one MXU matmul, K = 9*C_in, f32 accumulation. ----
        y = jnp.dot(w, col_ref[:, pl.ds(0, qc)],
                    preferred_element_type=jnp.float32,
                    precision=precision)
        y = y + b
        # Exact GELU (PyTorch default approximate='none').
        act = 0.5 * y * (1.0 + jax.lax.erf(y * inv_sqrt2))
        o_ref[0, :, pl.ds(q0, qc)] = act.astype(o_ref.dtype)


def _round_up(v, m):
    return (v + m - 1) // m * m


def _pick_cout_tile(c_out, q, cap=256, out_block_budget=16 << 20):
    """Largest C_out tile <= cap dividing C_out, bounded by a VMEM budget for
    the double-buffered f32-sized output block."""
    qpad = _round_up(max(q, 1), 128)
    cap = min(cap, max(8, out_block_budget // (2 * qpad * 4)))
    cap = max(8, cap // 8 * 8)
    if c_out <= cap:
        return c_out
    for t in range(cap, 7, -8):
        if c_out % t == 0:
            return t
    # No multiple-of-8 divisor <= cap: fall back to the full dim (only hit for
    # odd channel counts; may exceed the budget).
    return c_out


def _pick_q_chunk(q, target=512):
    """Lane-chunk size: full Q when small, otherwise a multiple of 128 so
    chunked output stores stay lane-aligned."""
    if q <= target:
        return q
    return max(128, target // 128 * 128)


def conv_bn_gelu_forward(x, conv_w, conv_b, gamma, beta,
                         running_mean, running_var, eps: float = 1e-5,
                         precision=None):
    """GELU(BatchNorm2d(Conv2d(3x3, padding=1)(x))) for NCHW input x."""
    N, C_in, H, W = x.shape
    C_out = conv_w.shape[0]

    # ---- Fold eval-mode BatchNorm into the conv weights / bias (tiny ops). ----
    scale = gamma / jnp.sqrt(running_var + eps)                    # (C_out,)
    w_f = conv_w * scale[:, None, None, None]                      # (C_out, C_in, 3, 3)
    b_f = (conv_b - running_mean) * scale + beta                   # (C_out,)
    # Collapsed-contraction weights: rows ordered (ky, kx, ci) to match the
    # in-kernel im2col stacking -> contiguous, lane-dense (C_out, 9*C_in).
    w2 = jnp.transpose(w_f, (0, 2, 3, 1)).reshape(C_out, 9 * C_in).astype(x.dtype)
    b2 = b_f.reshape(C_out, 1).astype(jnp.float32)

    # ---- Single zero-pad pass; flatten padded spatial onto the lane axis. ----
    # top=1, bottom=2 (extra slack row so every shifted tap slice stays
    # in-bounds for the 2 garbage columns per row), left=1, right=1.
    # NOTE: do not change the bottom pad of 2 without re-deriving the
    # in-kernel slice bounds (q_max + 2*Wp + 2 < P relies on it).
    Wp = W + 2
    xp = jnp.pad(x, ((0, 0), (0, 0), (1, 2), (1, 1)))
    P = (H + 3) * Wp
    xflat = xp.reshape(N, C_in, P)                                 # free reshape
    Q = H * Wp                                                     # W valid + 2 garbage per row

    tco = _pick_cout_tile(C_out, Q)
    q_chunk = _pick_q_chunk(Q)
    grid = (N, C_out // tco)

    # ---- VMEM budget: double-buffered blocks + im2col scratch (+ margin). ----
    isz = jnp.dtype(x.dtype).itemsize
    x_blk = _round_up(C_in, 8) * _round_up(P, 128) * isz
    w_blk = _round_up(tco, 8) * _round_up(9 * C_in, 128) * isz
    b_blk = _round_up(tco, 8) * 128 * 4
    o_blk = _round_up(tco, 8) * _round_up(Q, 128) * isz
    col_blk = _round_up(9 * C_in, 8) * _round_up(q_chunk, 128) * isz
    vmem_limit = int(max(32 << 20,
                         2 * (x_blk + w_blk + b_blk + o_blk) + col_blk + (2 << 20)))
    # TODO(synk): for very large images (2*x_blk + 2*o_blk approaching the v7x
    #             64 MiB VMEM), add a spatial row-group grid axis with a 2-row
    #             halo instead of the whole-image input block.

    cost = pl.CostEstimate(
        flops=2 * 9 * C_in * C_out * H * W * N,
        transcendentals=N * C_out * Q,
        bytes_accessed=int(N * C_in * P * isz + C_out * 9 * C_in * isz
                           + N * C_out * Q * isz),
    )

    kernel = functools.partial(_conv3x3_bn_gelu_kernel, Wp=Wp,
                               q_chunk=q_chunk, precision=precision)

    out = pl.pallas_call(
        kernel,
        out_shape=jax.ShapeDtypeStruct((N, C_out, Q), x.dtype),
        grid=grid,
        in_specs=[
            pl.BlockSpec((1, C_in, P), lambda n, co: (n, 0, 0)),     # input slab
            pl.BlockSpec((tco, 9 * C_in), lambda n, co: (co, 0)),    # folded weights
            pl.BlockSpec((tco, 1), lambda n, co: (co, 0)),           # folded bias
        ],
        out_specs=pl.BlockSpec((1, tco, Q), lambda n, co: (n, co, 0)),
        scratch_shapes=[pltpu.VMEM((9 * C_in, q_chunk), x.dtype)],
        compiler_params=pltpu.CompilerParams(
            dimension_semantics=("parallel", "parallel"),
            vmem_limit_bytes=vmem_limit),
        cost_estimate=cost,
    )(xflat, w2, b2)

    # (N, C_out, H, Wp): drop the 2 garbage columns per row -> (N, C_out, H, W).
    # TODO(synk): fold this crop into the consumer (or store W-cropped rows
    #             directly when W is 128-aligned) to avoid one extra HBM pass.
    return out.reshape(N, C_out, H, Wp)[:, :, :, :W]


def _reference(x, conv_w, conv_b, gamma, beta, running_mean, running_var,
               eps: float = 1e-5):
    y = jax.lax.conv_general_dilated(
        x, conv_w, window_strides=(1, 1), padding=((1, 1), (1, 1)),
        dimension_numbers=("NCHW", "OIHW", "NCHW"),
        precision=jax.lax.Precision.HIGHEST)
    y = y + conv_b[None, :, None, None]
    y = (y - running_mean[None, :, None, None]) / jnp.sqrt(
        running_var[None, :, None, None] + eps)
    y = y * gamma[None, :, None, None] + beta[None, :, None, None]
    return jax.nn.gelu(y, approximate=False)


if __name__ == "__main__":
    key = jax.random.PRNGKey(0)
    kx, kw, kb, kg, kbe, km, kv = jax.random.split(key, 7)

    N, C_in, C_out, H, W = 2, 4, 8, 16, 16
    x = jax.random.normal(kx, (N, C_in, H, W), dtype=jnp.float32)
    conv_w = 0.2 * jax.random.normal(kw, (C_out, C_in, 3, 3), dtype=jnp.float32)
    conv_b = 0.1 * jax.random.normal(kb, (C_out,), dtype=jnp.float32)
    gamma = 1.0 + 0.2 * jax.random.normal(kg, (C_out,), dtype=jnp.float32)
    beta = 0.1 * jax.random.normal(kbe, (C_out,), dtype=jnp.float32)
    running_mean = 0.1 * jax.random.normal(km, (C_out,), dtype=jnp.float32)
    running_var = jax.random.uniform(kv, (C_out,), jnp.float32, 0.5, 1.5)

    y_ref = _reference(x, conv_w, conv_b, gamma, beta,
                       running_mean, running_var)

    # Fast path: default single-pass MXU matmul (f32 operands rounded to bf16
    # on the MXU, f32 accumulation) -> compare with a loose tolerance.
    y = conv_bn_gelu_forward(x, conv_w, conv_b, gamma, beta,
                             running_mean, running_var)
    y = jax.block_until_ready(y)
    assert y.shape == (N, C_out, H, W), y.shape
    max_err_fast = float(jnp.max(jnp.abs(y - y_ref)))
    assert jnp.allclose(y, y_ref, atol=2e-2, rtol=2e-2), max_err_fast

    # Reference-precision path: bit-faithful f32 conv numerics.
    y_hi = conv_bn_gelu_forward(x, conv_w, conv_b, gamma, beta,
                                running_mean, running_var,
                                precision=jax.lax.Precision.HIGHEST)
    y_hi = jax.block_until_ready(y_hi)
    max_err_hi = float(jnp.max(jnp.abs(y_hi - y_ref)))
    assert jnp.allclose(y_hi, y_ref, atol=1e-3, rtol=1e-3), max_err_hi

    print("KERNEL_OK")
</pallas_src>

<mosaic_0001>
module attributes {stable_mosaic.version = 11 : i64} {
  func.func @_conv3x3_bn_gelu_kernel(%arg0: i32, %arg1: i32, %arg2: memref<1x4x342xf32, #tpu.memory_space<vmem>>, %arg3: memref<8x36xf32, #tpu.memory_space<vmem>>, %arg4: memref<8x1xf32, #tpu.memory_space<vmem>>, %arg5: memref<1x8x288xf32, #tpu.memory_space<vmem>>, %arg6: memref<36x288xf32, #tpu.memory_space<vmem>>) attributes {dimension_semantics = [#tpu.dimension_semantics<parallel>, #tpu.dimension_semantics<parallel>], iteration_bounds = array<i64: 2, 1>, scalar_prefetch = 0 : i64, scratch_operands = 1 : i64, tpu.core_type = #tpu.core_type<tc>, window_params = [{transform_indices = @transform_0, window_bounds = array<i64: 1, 4, 342>}, {transform_indices = @transform_1, window_bounds = array<i64: 8, 36>}, {transform_indices = @transform_2, window_bounds = array<i64: 8, 1>}, {transform_indices = @transform_3, window_bounds = array<i64: 1, 8, 288>}]} {
    %c0 = arith.constant 0 : index
    %c0_0 = arith.constant 0 : index
    %0 = vector.load %arg3[%c0, %c0_0] : memref<8x36xf32, #tpu.memory_space<vmem>>, vector<8x36xf32>
    %c0_1 = arith.constant 0 : index
    %c0_2 = arith.constant 0 : index
    %1 = vector.load %arg4[%c0_1, %c0_2] : memref<8x1xf32, #tpu.memory_space<vmem>>, vector<8x1xf32>
    %c0_3 = arith.constant 0 : index
    %c0_4 = arith.constant 0 : index
    %c0_5 = arith.constant 0 : index
    %2 = vector.load %arg2[%c0_3, %c0_4, %c0_5] : memref<1x4x342xf32, #tpu.memory_space<vmem>>, vector<1x4x288xf32>
    %3 = vector.shape_cast %2 : vector<1x4x288xf32> to vector<4x288xf32>
    %c0_6 = arith.constant 0 : index
    %c0_7 = arith.constant 0 : index
    %4 = vector.load %arg6[%c0_6, %c0_7] : memref<36x288xf32, #tpu.memory_space<vmem>>, vector<4x288xf32>
    tpu.vector_store %arg6[%c0_6, %c0_7], %3 {strides = array<i32>} : memref<36x288xf32, #tpu.memory_space<vmem>>, vector<4x288xf32>,
    %c0_8 = arith.constant 0 : index
    %c0_9 = arith.constant 0 : index
    %c1 = arith.constant 1 : index
    %5 = vector.load %arg2[%c0_8, %c0_9, %c1] : memref<1x4x342xf32, #tpu.memory_space<vmem>>, vector<1x4x288xf32>
    %6 = vector.shape_cast %5 : vector<1x4x288xf32> to vector<4x288xf32>
    %c4 = arith.constant 4 : index
    %c0_10 = arith.constant 0 : index
    %7 = vector.load %arg6[%c4, %c0_10] : memref<36x288xf32, #tpu.memory_space<vmem>>, vector<4x288xf32>
    tpu.vector_store %arg6[%c4, %c0_10], %6 {strides = array<i32>} : memref<36x288xf32, #tpu.memory_space<vmem>>, vector<4x288xf32>,
    %c0_11 = arith.constant 0 : index
    %c0_12 = arith.constant 0 : index
    %c2 = arith.constant 2 : index
    %8 = vector.load %arg2[%c0_11, %c0_12, %c2] : memref<1x4x342xf32, #tpu.memory_space<vmem>>, vector<1x4x288xf32>
    %9 = vector.shape_cast %8 : vector<1x4x288xf32> to vector<4x288xf32>
    %c8 = arith.constant 8 : index
    %c0_13 = arith.constant 0 : index
    %10 = vector.load %arg6[%c8, %c0_13] : memref<36x288xf32, #tpu.memory_space<vmem>>, vector<4x288xf32>
    tpu.vector_store %arg6[%c8, %c0_13], %9 {strides = array<i32>} : memref<36x288xf32, #tpu.memory_space<vmem>>, vector<4x288xf32>,
    %c0_14 = arith.constant 0 : index
    %c0_15 = arith.constant 0 : index
    %c18 = arith.constant 18 : index
    %11 = vector.load %arg2[%c0_14, %c0_15, %c18] : memref<1x4x342xf32, #tpu.memory_space<vmem>>, vector<1x4x288xf32>
    %12 = vector.shape_cast %11 : vector<1x4x288xf32> to vector<4x288xf32>
    %c12 = arith.constant 12 : index
    %c0_16 = arith.constant 0 : index
    %13 = vector.load %arg6[%c12, %c0_16] : memref<36x288xf32, #tpu.memory_space<vmem>>, vector<4x288xf32>
    tpu.vector_store %arg6[%c12, %c0_16], %12 {strides = array<i32>} : memref<36x288xf32, #tpu.memory_space<vmem>>, vector<4x288xf32>,
    %c0_17 = arith.constant 0 : index
    %c0_18 = arith.constant 0 : index
    %c19 = arith.constant 19 : index
    %14 = vector.load %arg2[%c0_17, %c0_18, %c19] : memref<1x4x342xf32, #tpu.memory_space<vmem>>, vector<1x4x288xf32>
    %15 = vector.shape_cast %14 : vector<1x4x288xf32> to vector<4x288xf32>
    %c16 = arith.constant 16 : index
    %c0_19 = arith.constant 0 : index
    %16 = vector.load %arg6[%c16, %c0_19] : memref<36x288xf32, #tpu.memory_space<vmem>>, vector<4x288xf32>
    tpu.vector_store %arg6[%c16, %c0_19], %15 {strides = array<i32>} : memref<36x288xf32, #tpu.memory_space<vmem>>, vector<4x288xf32>,
    %c0_20 = arith.constant 0 : index
    %c0_21 = arith.constant 0 : index
    %c20 = arith.constant 20 : index
    %17 = vector.load %arg2[%c0_20, %c0_21, %c20] : memref<1x4x342xf32, #tpu.memory_space<vmem>>, vector<1x4x288xf32>
    %18 = vector.shape_cast %17 : vector<1x4x288xf32> to vector<4x288xf32>
    %c20_22 = arith.constant 20 : index
    %c0_23 = arith.constant 0 : index
    %19 = vector.load %arg6[%c20_22, %c0_23] : memref<36x288xf32, #tpu.memory_space<vmem>>, vector<4x288xf32>
    tpu.vector_store %arg6[%c20_22, %c0_23], %18 {strides = array<i32>} : memref<36x288xf32, #tpu.memory_space<vmem>>, vector<4x288xf32>,
    %c0_24 = arith.constant 0 : index
    %c0_25 = arith.constant 0 : index
    %c36 = arith.constant 36 : index
    %20 = vector.load %arg2[%c0_24, %c0_25, %c36] : memref<1x4x342xf32, #tpu.memory_space<vmem>>, vector<1x4x288xf32>
    %21 = vector.shape_cast %20 : vector<1x4x288xf32> to vector<4x288xf32>
    %c24 = arith.constant 24 : index
    %c0_26 = arith.constant 0 : index
    %22 = vector.load %arg6[%c24, %c0_26] : memref<36x288xf32, #tpu.memory_space<vmem>>, vector<4x288xf32>
    tpu.vector_store %arg6[%c24, %c0_26], %21 {strides = array<i32>} : memref<36x288xf32, #tpu.memory_space<vmem>>, vector<4x288xf32>,
    %c0_27 = arith.constant 0 : index
    %c0_28 = arith.constant 0 : index
    %c37 = arith.constant 37 : index
    %23 = vector.load %arg2[%c0_27, %c0_28, %c37] : memref<1x4x342xf32, #tpu.memory_space<vmem>>, vector<1x4x288xf32>
    %24 = vector.shape_cast %23 : vector<1x4x288xf32> to vector<4x288xf32>
    %c28 = arith.constant 28 : index
    %c0_29 = arith.constant 0 : index
    %25 = vector.load %arg6[%c28, %c0_29] : memref<36x288xf32, #tpu.memory_space<vmem>>, vector<4x288xf32>
    tpu.vector_store %arg6[%c28, %c0_29], %24 {strides = array<i32>} : memref<36x288xf32, #tpu.memory_space<vmem>>, vector<4x288xf32>,
    %c0_30 = arith.constant 0 : index
    %c0_31 = arith.constant 0 : index
    %c38 = arith.constant 38 : index
    %26 = vector.load %arg2[%c0_30, %c0_31, %c38] : memref<1x4x342xf32, #tpu.memory_space<vmem>>, vector<1x4x288xf32>
    %27 = vector.shape_cast %26 : vector<1x4x288xf32> to vector<4x288xf32>
    %c32 = arith.constant 32 : index
    %c0_32 = arith.constant 0 : index
    %28 = vector.load %arg6[%c32, %c0_32] : memref<36x288xf32, #tpu.memory_space<vmem>>, vector<4x288xf32>
    tpu.vector_store %arg6[%c32, %c0_32], %27 {strides = array<i32>} : memref<36x288xf32, #tpu.memory_space<vmem>>, vector<4x288xf32>,
    %c0_33 = arith.constant 0 : index
    %c0_34 = arith.constant 0 : index
    %29 = vector.load %arg6[%c0_33, %c0_34] : memref<36x288xf32, #tpu.memory_space<vmem>>, vector<36x288xf32>
    %cst = arith.constant dense<0.000000e+00> : vector<8x288xf32>
    %30 = tpu.matmul %0, %29, %cst {dimension_numbers = #tpu.dot_dimension_numbers<[1], [0], [0], [1], [0, 0, 1, 1], [], []>} : vector<8x36xf32>, vector<36x288xf32>, vector<8x288xf32> -> vector<8x288xf32>
    %31 = vector.broadcast %1 : vector<8x1xf32> to vector<8x288xf32>
    %32 = arith.addf %30, %31 : vector<8x288xf32>
    %cst_35 = arith.constant 5.000000e-01 : f32
    %33 = vector.broadcast %cst_35 : f32 to vector<8x288xf32>
    %34 = arith.mulf %33, %32 : vector<8x288xf32>
    %cst_36 = arith.constant 0.707106769 : f32
    %35 = vector.broadcast %cst_36 : f32 to vector<8x288xf32>
    %36 = arith.mulf %32, %35 : vector<8x288xf32>
    %37 = math.erf %36 : vector<8x288xf32>
    %cst_37 = arith.constant 1.000000e+00 : f32
    %38 = vector.broadcast %cst_37 : f32 to vector<8x288xf32>
    %39 = arith.addf %38, %37 : vector<8x288xf32>
    %40 = arith.mulf %34, %39 : vector<8x288xf32>
    %c0_38 = arith.constant 0 : index
    %c0_39 = arith.constant 0 : index
    %c0_40 = arith.constant 0 : index
    %41 = vector.load %arg5[%c0_38, %c0_39, %c0_40] : memref<1x8x288xf32, #tpu.memory_space<vmem>>, vector<1x8x288xf32>
    %42 = vector.shape_cast %41 : vector<1x8x288xf32> to vector<8x288xf32>
    %43 = vector.shape_cast %40 : vector<8x288xf32> to vector<1x8x288xf32>
    tpu.vector_store %arg5[%c0_38, %c0_39, %c0_40], %43 {strides = array<i32>} : memref<1x8x288xf32, #tpu.memory_space<vmem>>, vector<1x8x288xf32>,
    return
  }
  func.func @transform_0(%arg0: i32, %arg1: i32) -> (i32, i32, i32) {
    %c0_i32 = arith.constant 0 : i32
    %c0_i32_0 = arith.constant 0 : i32
    %c0_i32_1 = arith.constant 0 : i32
    return %arg0, %c0_i32, %c0_i32_0 : i32, i32, i32
  }
  func.func @transform_1(%arg0: i32, %arg1: i32) -> (i32, i32) {
    %c0_i32 = arith.constant 0 : i32
    %c0_i32_0 = arith.constant 0 : i32
    return %arg1, %c0_i32 : i32, i32
  }
  func.func @transform_2(%arg0: i32, %arg1: i32) -> (i32, i32) {
    %c0_i32 = arith.constant 0 : i32
    %c0_i32_0 = arith.constant 0 : i32
    return %arg1, %c0_i32 : i32, i32
  }
  func.func @transform_3(%arg0: i32, %arg1: i32) -> (i32, i32, i32) {
    %c0_i32 = arith.constant 0 : i32
    %c0_i32_0 = arith.constant 0 : i32
    return %arg0, %arg1, %c0_i32 : i32, i32, i32
  }
}

</mosaic_0001>

<llo_original>
// kernel: tpu_custom_call.1
$region0: #{tpu_custom_call.1}
  #allocation0 [shape = 'u32[]', space=smem, size = 0x4, offset = 0x4, fixed_abs, tag = 'smem constant byte address 0x4 - core index']
  #allocation1 [shape = 'u32[72,128]{1,0:T(1,128)}', space=vmem, size = 0x9000, scoped, tag = 'internal scratch']
  #allocation2 [shape = 'f32[36,288]{1,0:T(8,128)}', space=vmem, size = 0xf000, scoped, tag = 'scratch operand']
  %s0 = inlined_call_operand.hbm [shape: f32[2,4,342], index: 0, kind: input, shape index: {}]
  %s1 = inlined_call_operand.vmem [shape: f32[8,36], index: 1, kind: input, shape index: {}]
  %s2 = inlined_call_operand.vmem [shape: f32[8,1], index: 2, kind: input, shape index: {}]
  %s3 = inlined_call_operand.hbm [shape: f32[2,8,288], index: 3, kind: output, shape index: {}]
  %s4 = sld [smem:[#allocation0]]
  $region49: #{tpu_custom_call.1} parent=0
    _
  %s6 = ssub.s32 1, %s4
  %s7 = scalar_select 0, %s6, %s4
  $region1: #{tpu_custom_call.1} parent=0
    #allocation3 [shape = 'u8[12288]{0}', space=vmem, size = 0x3000, scoped, tag = 'input window, operand 0']
    #allocation4 [shape = 's32[2]{0}', space=sflag, size = 0x8, scoped, tag = 'scoped memory for tpu_custom_call.1']
    #allocation5 [shape = 's32[2]{0}', space=sflag, size = 0x8, scoped, tag = 'scoped memory for tpu_custom_call.1']
    #allocation6 [shape = 'u8[24576]{0}', space=vmem, size = 0x6000, scoped, tag = 'output window, operand 0']
    %8 = vsyncpa [#allocation4], 0
    %s9 = scalar_lea.sflag [#allocation4], 1
    %10 = vsyncpa %s9, 0
    %11 = vsyncpa [#allocation5], 0
    %s12 = scalar_lea.sflag [#allocation5], 1
    %13 = vsyncpa %s12, 0
    loop: start=0, step=1, limit=4
    $region2: #{tpu_custom_call.1} parent=1 // loop_pre_header
      _
    $region3: #{tpu_custom_call.1} parent=1 // loop_header
      %s15 = sphi 0, %s19
      %p16 = scmp.ge.s32.totalorder %s15, 4
      %s22 = sphi 0, %s34
      %s23 = sphi 0, %s30
      %s24 = sphi 0, %s22
      %s25 = sphi 0, %s23
      %s26 = sphi 0, %s24
      %s27 = sphi 0, %s25
      %s37 = sphi 0, %s39
      %s40 = sphi 0, %s37
      %s41 = sphi 0, %s40
      %s57 = sphi 0, %s41
      %s63 = sphi 0, %s65
      %s66 = sphi 0, %s63
      %s67 = sphi 0, %s66
      %s83 = sphi 0, %s67
      %s89 = sphi 0, %s91
      %s92 = sphi 0, %s89
      %s93 = sphi 0, %s92
      %s109 = sphi 0, %s93
      %s117 = sphi 0, %s119
      %s120 = sphi 0, %s117
      %s121 = sphi 0, %s120
      %s137 = sphi 0, %s121
    $region4: #{tpu_custom_call.1} parent=1 // loop_header_branch
      %18 = sbr.rel (%p16) target = $region8
    $region5: #{tpu_custom_call.1} parent=1 // loop_body
      %s20 = ssub.s32 %s15, 1
      %s21 = ssub.s32 %s15, 2
      %s28 = sadd.s32 1, %s23
      %p29 = scmp.ge.s32.totalorder %s28, 1
      %s30 = scalar_select %p29, 0, %s28
      %s31 = sadd.s32 1, %s22
      %s32 = scalar_select %p29, %s31, %s22
      %p33 = scmp.ge.s32.totalorder %s32, 2
      %s34 = scalar_select %p33, 0, %s32
      %s35 = ssub.s32 %s22, %s34
      %p36 = scmp.eq.s32.totalorder %s35, 0
      %s38 = sadd.s32 %s37, 1
      %s39 = scalar_select %p36, %s37, %s38
      %p42 = pneg %p36
      %p43 = scmp.eq.s32.totalorder %s15, 1
      %p44 = por %p42, %p43
      %p45 = scmp.ne.s32.totalorder %s37, %s40
      %p46 = scmp.eq.s32.totalorder %s15, 0
      %p47 = por %p45, %p46
      %p48 = scmp.ne.s32.totalorder %s37, %s40
      %p49 = scmp.eq.s32.totalorder %s20, 1
      %p50 = por %p48, %p49
      %p51 = scmp.ne.s32.totalorder %s40, %s41
      %p52 = scmp.eq.s32.totalorder %s20, 0
      %p53 = por %p51, %p52
      %p54 = scmp.ne.s32.totalorder %s40, %s41
      %p55 = scmp.eq.s32.totalorder %s21, 1
      %p56 = por %p54, %p55
      %p58 = scmp.ne.s32.totalorder %s41, %s57
      %p59 = scmp.eq.s32.totalorder %s21, 0
      %p60 = por %p58, %p59
      %s61 = ssub.s32 %s23, %s30
      %p62 = scmp.eq.s32.totalorder %s61, 0
      %s64 = sadd.s32 %s63, 1
      %s65 = scalar_select %p62, %s63, %s64
      %p68 = pneg %p62
      %p69 = scmp.eq.s32.totalorder %s15, 1
      %p70 = por %p68, %p69
      %p71 = scmp.ne.s32.totalorder %s63, %s66
      %p72 = scmp.eq.s32.totalorder %s15, 0
      %p73 = por %p71, %p72
      %p74 = scmp.ne.s32.totalorder %s63, %s66
      %p75 = scmp.eq.s32.totalorder %s20, 1
      %p76 = por %p74, %p75
      %p77 = scmp.ne.s32.totalorder %s66, %s67
      %p78 = scmp.eq.s32.totalorder %s20, 0
      %p79 = por %p77, %p78
      %p80 = scmp.ne.s32.totalorder %s66, %s67
      %p81 = scmp.eq.s32.totalorder %s21, 1
      %p82 = por %p80, %p81
      %p84 = scmp.ne.s32.totalorder %s67, %s83
      %p85 = scmp.eq.s32.totalorder %s21, 0
      %p86 = por %p84, %p85
      %s87 = ssub.s32 %s23, %s30
      %p88 = scmp.eq.s32.totalorder %s87, 0
      %s90 = sadd.s32 %s89, 1
      %s91 = scalar_select %p88, %s89, %s90
      %p94 = pneg %p88
      %p95 = scmp.eq.s32.totalorder %s15, 1
      %p96 = por %p94, %p95
      %p97 = scmp.ne.s32.totalorder %s89, %s92
      %p98 = scmp.eq.s32.totalorder %s15, 0
      %p99 = por %p97, %p98
      %p100 = scmp.ne.s32.totalorder %s89, %s92
      %p101 = scmp.eq.s32.totalorder %s20, 1
      %p102 = por %p100, %p101
      %p103 = scmp.ne.s32.totalorder %s92, %s93
      %p104 = scmp.eq.s32.totalorder %s20, 0
      %p105 = por %p103, %p104
      %p106 = scmp.ne.s32.totalorder %s92, %s93
      %p107 = scmp.eq.s32.totalorder %s21, 1
      %p108 = por %p106, %p107
      %p110 = scmp.ne.s32.totalorder %s93, %s109
      %p111 = scmp.eq.s32.totalorder %s21, 0
      %p112 = por %p110, %p111
      %s113 = ssub.s32 %s22, %s34
      %s114 = ssub.s32 %s23, %s30
      %s115 = sor.u32 %s113, %s114
      %p116 = scmp.eq.s32.totalorder %s115, 0
      %s118 = sadd.s32 %s117, 1
      %s119 = scalar_select %p116, %s117, %s118
      %p122 = pneg %p116
      %p123 = scmp.eq.s32.totalorder %s15, 1
      %p124 = por %p122, %p123
      %p125 = scmp.ne.s32.totalorder %s117, %s120
      %p126 = scmp.eq.s32.totalorder %s15, 0
      %p127 = por %p125, %p126
      %p128 = scmp.ne.s32.totalorder %s117, %s120
      %p129 = scmp.eq.s32.totalorder %s20, 1
      %p130 = por %p128, %p129
      %p131 = scmp.ne.s32.totalorder %s120, %s121
      %p132 = scmp.eq.s32.totalorder %s20, 0
      %p133 = por %p131, %p132
      %p134 = scmp.ne.s32.totalorder %s120, %s121
      %p135 = scmp.eq.s32.totalorder %s21, 1
      %p136 = por %p134, %p135
      %p138 = scmp.ne.s32.totalorder %s121, %s137
      %p139 = scmp.eq.s32.totalorder %s21, 0
      %p140 = por %p138, %p139
      %p141 = scmp.le.s32.totalorder 1, %s15
      %p142 = scmp.lt.s32.totalorder %s15, 3
      %p143 = pnand %p141, %p142
      %p144 = pneg %p143
      // Predicated region
      $region9: #{tpu_custom_call.1} parent=5 // pred_check
        _
      $region10: #{tpu_custom_call.1} parent=5 // pred_check_branch
        %146 = sbr.rel (%p143) target = $region12
      $region11: #{tpu_custom_call.1} parent=5 // pred_region
        %s147 = ssub.s32 %s15, 1
        // Predicated region
        $region13: #{tpu_custom_call.1} parent=11 // pred_check
          %p148 = pneg %p79
        $region14: #{tpu_custom_call.1} parent=11 // pred_check_branch
          %150 = sbr.rel (%p148) target = $region16
        $region15: #{tpu_custom_call.1} parent=11 // pred_region
          %p151 = scmp.lt.s32.totalorder %s25, 0
          %s152 = scalar_select %p151, %s25, 0
          %s153 = smul.addr %s152, 8
          %s154 = scalar_lea.vmem %s1, %s153
        $region16: #{tpu_custom_call.1} parent=11 // pred_fallthru
          _
        // Predicated region
        $region17: #{tpu_custom_call.1} parent=11 // pred_check
          %p155 = pneg %p105
        $region18: #{tpu_custom_call.1} parent=11 // pred_check_branch
          %157 = sbr.rel (%p155) target = $region20
        $region19: #{tpu_custom_call.1} parent=11 // pred_region
          %p158 = scmp.lt.s32.totalorder %s25, 0
          %s159 = scalar_select %p158, %s25, 0
          %s160 = smul.addr %s159, 8
          %s161 = scalar_lea.vmem %s2, %s160
        $region20: #{tpu_custom_call.1} parent=11 // pred_fallthru
          _
      $region12: #{tpu_custom_call.1} parent=5 // pred_fallthru
        _
      %p162 = scmp.lt.s32.totalorder %s15, 2
      // Predicated region
      $region21: #{tpu_custom_call.1} parent=5 // pred_check
        %p163 = pneg %p162
      $region22: #{tpu_custom_call.1} parent=5 // pred_check_branch
        %165 = sbr.rel (%p163) target = $region24
      $region23: #{tpu_custom_call.1} parent=5 // pred_region
        // Predicated region
        $region25: #{tpu_custom_call.1} parent=23 // pred_check
          %p166 = pneg %p47
        $region26: #{tpu_custom_call.1} parent=23 // pred_check_branch
          %168 = sbr.rel (%p166) target = $region28
        $region27: #{tpu_custom_call.1} parent=23 // pred_region
          %s169 = sand.u32 %s37, 1
          %s170 = scalar_lea.sflag [#allocation4], %s169
          %s171 = sand.u32 %s37, 1
          %s172 = smul.addr %s171, 12
          %s173 = scalar_lea.vmem [#allocation3], %s172
          %175 = vsyncadd %s170, 0
          %s176 = smul.addr %s22, 3
          %s177 = smul.addr %s176, 4
          %s178 = scalar_lea.hbm %s0, %s177
          %s180 = sshll.u32 %s178, 4
          %s181 = int_to_ptr.hbm [resolvable:$true] %s180
          %s182 = sshll.u32 %s173, 4
          %s183 = int_to_ptr.vmem [resolvable:$true] %s182
          %185 = dma.hbm_to_vmem [thread:$0]  %s181, 192, %s183, %s170
        $region28: #{tpu_custom_call.1} parent=23 // pred_fallthru
          _
      $region24: #{tpu_custom_call.1} parent=5 // pred_fallthru
        _
      %p186 = scmp.le.s32.totalorder 1, %s15
      %p187 = scmp.lt.s32.totalorder %s15, 3
      %p188 = pnand %p186, %p187
      %p189 = pneg %p188
      // Predicated region
      $region29: #{tpu_custom_call.1} parent=5 // pred_check
        _
      $region30: #{tpu_custom_call.1} parent=5 // pred_check_branch
        %191 = sbr.rel (%p188) target = $region32
      $region31: #{tpu_custom_call.1} parent=5 // pred_region
        %s192 = ssub.s32 %s15, 1
        %s193 = sand.u32 %s40, 1
        %s194 = scalar_lea.sflag [#allocation4], %s193
        %s195 = sand.u32 %s40, 1
        %s196 = smul.addr %s195, 12
        %s197 = scalar_lea.vmem [#allocation3], %s196
        // Predicated region
        $region33: #{tpu_custom_call.1} parent=31 // pred_check
          %p198 = pneg %p53
        $region34: #{tpu_custom_call.1} parent=31 // pred_check_branch
          %200 = sbr.rel (%p198) target = $region36
        $region35: #{tpu_custom_call.1} parent=31 // pred_region
          %202 = dma.done %s194, 192
        $region36: #{tpu_custom_call.1} parent=31 // pred_fallthru
          _
        %s203 = sand.u32 %s40, 1
        %s204 = scalar_lea.sflag [#allocation4], %s203
        %s205 = sand.u32 %s40, 1
        %s206 = smul.addr %s205, 12
        %s207 = scalar_lea.vmem [#allocation3], %s206
        %p208 = pneg %p53
        %p209 = pneg %p50
        %p210 = scmp.lt.s32.totalorder %s25, 0
        %s211 = scalar_select %p210, %s25, 0
        %s212 = smul.addr %s211, 8
        %s213 = scalar_lea.vmem %s1, %s212
        %p214 = pneg %p79
        %p215 = pneg %p76
        %p216 = scmp.lt.s32.totalorder %s25, 0
        %s217 = scalar_select %p216, %s25, 0
        %s218 = smul.addr %s217, 8
        %s219 = scalar_lea.vmem %s2, %s218
        %p220 = pneg %p105
        %p221 = pneg %p102
        %p222 = pneg %p133
        %p223 = pneg %p130
        %s224 = sand.u32 %s120, 1
        %s225 = scalar_lea.sflag [#allocation5], %s224
        %s226 = sand.u32 %s120, 1
        %s227 = smul.addr %s226, 24
        %s228 = scalar_lea.vmem [#allocation6], %s227
        %p229 = scmp.lt.s32.totalorder %s25, 0
        %s230 = scalar_select %p229, %s25, 0
        %s231 = smul.addr %s230, 8
        %s232 = scalar_lea.vmem %s1, %s231
        %p233 = scmp.lt.s32.totalorder %s25, 0
        %s234 = scalar_select %p233, %s25, 0
        %s235 = smul.addr %s234, 8
        %s236 = scalar_lea.vmem %s2, %s235
        %v237 = vld [vmem:[%s232] sm:$0xff]
        %v238 = vld [vmem:[%s236] sm:$0xff]
        %v239 = vld [vmem:[%s197] sm:$0xff]
        %v240 = vld [vmem:[%s197 + $0x8] sm:$0xf]
        %243 = vst [vmem:[#allocation1] ss:$2 sm:$0xff] %v239
        %s244 = scalar_lea.vmem [#allocation1], 16
        %245 = vst [vmem:[%s244] ss:$2 sm:$0xff] %v240
        %v246 = vld.sshfl [vmem:[#allocation1] sm:$0xff pattern:$0x75316420]
        %v247 = vld.sshfl [vmem:[#allocation1 + $0x8] sm:$0xff pattern:$0x75316420]
        %v248 = vld.sshfl [vmem:[#allocation1 + $0x10] sm:$0xff pattern:$0x75316420]
        %252 = vst [vmem:[#allocation2] sm:$0xf] %v246
        %253 = vst [vmem:[#allocation2 + $0x8] sm:$0xf] %v247
        %vm254 = vcmask 257024
        %255 = vst.msk [vmem:[#allocation2 + $0x10] sm:$0xf] %vm254, %v248
        %v256 = vld [vmem:[%s197] sm:$0xff]
        %v257 = vld [vmem:[%s197 + $0x8] sm:$0xf]
        %s260 = scalar_lea.vmem [#allocation1], 1
        %261 = vst [vmem:[%s260] ss:$2 sm:$0xff] %v256
        %s262 = scalar_lea.vmem [#allocation1], 17
        %263 = vst [vmem:[%s262] ss:$2 sm:$0xff] %v257
        %v264 = vld.sshfl [vmem:[#allocation1] sm:$0xff pattern:$0x75316420]
        %v265 = vld.sshfl [vmem:[#allocation1 + $0x8] sm:$0xff pattern:$0x75316420]
        %v266 = vld.sshfl [vmem:[#allocation1 + $0x10] sm:$0xff pattern:$0x75316420]
        %267 = vrot.lane.b32.xlu0 %v264, 127
        %v268 = vpop.permute.xlu0 %267
        %269 = vrot.lane.b32.xlu0 %v265, 127
        %v270 = vpop.permute.xlu0 %269
        %271 = vrot.lane.b32.xlu0 %v266, 127
        %v272 = vpop.permute.xlu0 %271
        %vm273 = vcmask 1039360
        %v274 = vsel %vm273, %v268, %v270
        %v275 = vsel %vm273, %v270, %v272
        %279 = vst [vmem:[#allocation2] sm:$0xf0] %v274
        %280 = vst [vmem:[#allocation2 + $0x8] sm:$0xf0] %v275
        %vm281 = vcmask 261124
        %282 = vst.msk [vmem:[#allocation2 + $0x10] sm:$0xf0] %vm281, %v272
        %v283 = vld [vmem:[%s197] sm:$0xff]
        %v284 = vld [vmem:[%s197 + $0x8] sm:$0xf]
        %287 = vst [vmem:[#allocation1] ss:$2 sm:$0xff] %v283
        %s288 = scalar_lea.vmem [#allocation1], 16
        %289 = vst [vmem:[%s288] ss:$2 sm:$0xff] %v284
        %v290 = vld.sshfl [vmem:[#allocation1] sm:$0xff pattern:$0x75316420]
        %v291 = vld.sshfl [vmem:[#allocation1 + $0x8] sm:$0xff pattern:$0x75316420]
        %v292 = vld.sshfl [vmem:[#allocation1 + $0x10] sm:$0xff pattern:$0x75316420]
        %293 = vrot.lane.b32.xlu0 %v290, 126
        %v294 = vpop.permute.xlu0 %293
        %295 = vrot.lane.b32.xlu0 %v291, 126
        %v296 = vpop.permute.xlu0 %295
        %297 = vrot.lane.b32.xlu0 %v292, 126
        %v298 = vpop.permute.xlu0 %297
        %vm299 = vcmask 1031168
        %v300 = vsel %vm299, %v294, %v296
        %v301 = vsel %vm299, %v296, %v298
        %305 = vst [vmem:[#allocation2 + $0x18] sm:$0xf] %v300
        %306 = vst [vmem:[#allocation2 + $0x20] sm:$0xf] %v301
        %307 = vst.msk [vmem:[#allocation2 + $0x28] sm:$0xf] %vm254, %v298
        %v308 = vld [vmem:[%s197] sm:$0xff]
        %v309 = vld [vmem:[%s197 + $0x8] sm:$0xf]
        %s312 = scalar_lea.vmem [#allocation1], 1
        %313 = vst [vmem:[%s312] ss:$2 sm:$0xff] %v308
        %s314 = scalar_lea.vmem [#allocation1], 17
        %315 = vst [vmem:[%s314] ss:$2 sm:$0xff] %v309
        %v316 = vld.sshfl [vmem:[#allocation1] sm:$0xff pattern:$0x75316420]
        %v317 = vld.sshfl [vmem:[#allocation1 + $0x8] sm:$0xff pattern:$0x75316420]
        %v318 = vld.sshfl [vmem:[#allocation1 + $0x10] sm:$0xff pattern:$0x75316420]
        %319 = vrot.lane.b32.xlu0 %v316, 110
        %v320 = vpop.permute.xlu0 %319
        %321 = vrot.lane.b32.xlu0 %v317, 110
        %v322 = vpop.permute.xlu0 %321
        %323 = vrot.lane.b32.xlu0 %v318, 110
        %v324 = vpop.permute.xlu0 %323
        %vm325 = vcmask 900096
        %v326 = vsel %vm325, %v320, %v322
        %v327 = vsel %vm325, %v322, %v324
        %331 = vst [vmem:[#allocation2 + $0x18] sm:$0xf0] %v326
        %332 = vst [vmem:[#allocation2 + $0x20] sm:$0xf0] %v327
        %333 = vst.msk [vmem:[#allocation2 + $0x28] sm:$0xf0] %vm281, %v324
        %v334 = vld [vmem:[%s197] sm:$0xff]
        %v335 = vld [vmem:[%s197 + $0x8] sm:$0xf]
        %338 = vst [vmem:[#allocation1] ss:$2 sm:$0xff] %v334
        %s339 = scalar_lea.vmem [#allocation1], 16
        %340 = vst [vmem:[%s339] ss:$2 sm:$0xff] %v335
        %v341 = vld.sshfl [vmem:[#allocation1] sm:$0xff pattern:$0x75316420]
        %v342 = vld.sshfl [vmem:[#allocation1 + $0x8] sm:$0xff pattern:$0x75316420]
        %v343 = vld.sshfl [vmem:[#allocation1 + $0x10] sm:$0xff pattern:$0x75316420]
        %344 = vrot.lane.b32.xlu0 %v341, 109
        %v345 = vpop.permute.xlu0 %344
        %346 = vrot.lane.b32.xlu0 %v342, 109
        %v347 = vpop.permute.xlu0 %346
        %348 = vrot.lane.b32.xlu0 %v343, 109
        %v349 = vpop.permute.xlu0 %348
        %vm350 = vcmask 891904
        %v351 = vsel %vm350, %v345, %v347
        %v352 = vsel %vm350, %v347, %v349
        %356 = vst [vmem:[#allocation2 + $0x30] sm:$0xf] %v351
        %357 = vst [vmem:[#allocation2 + $0x38] sm:$0xf] %v352
        %358 = vst.msk [vmem:[#allocation2 + $0x40] sm:$0xf] %vm254, %v349
        %v359 = vld [vmem:[%s197] sm:$0xff]
        %v360 = vld [vmem:[%s197 + $0x8] sm:$0xf]
        %s363 = scalar_lea.vmem [#allocation1], 1
        %364 = vst [vmem:[%s363] ss:$2 sm:$0xff] %v359
        %s365 = scalar_lea.vmem [#allocation1], 17
        %366 = vst [vmem:[%s365] ss:$2 sm:$0xff] %v360
        %v367 = vld.sshfl [vmem:[#allocation1] sm:$0xff pattern:$0x75316420]
        %v368 = vld.sshfl [vmem:[#allocation1 + $0x8] sm:$0xff pattern:$0x75316420]
        %v369 = vld.sshfl [vmem:[#allocation1 + $0x10] sm:$0xff pattern:$0x75316420]
        %370 = vrot.lane.b32.xlu0 %v367, 108
        %v371 = vpop.permute.xlu0 %370
        %372 = vrot.lane.b32.xlu0 %v368, 108
        %v373 = vpop.permute.xlu0 %372
        %374 = vrot.lane.b32.xlu0 %v369, 108
        %v375 = vpop.permute.xlu0 %374
        %vm376 = vcmask 883712
        %v377 = vsel %vm376, %v371, %v373
        %v378 = vsel %vm376, %v373, %v375
        %382 = vst [vmem:[#allocation2 + $0x30] sm:$0xf0] %v377
        %383 = vst [vmem:[#allocation2 + $0x38] sm:$0xf0] %v378
        %384 = vst.msk [vmem:[#allocation2 + $0x40] sm:$0xf0] %vm281, %v375
        %v385 = vld [vmem:[%s197] sm:$0xff]
        %v386 = vld [vmem:[%s197 + $0x8] sm:$0xf]
        %389 = vst [vmem:[#allocation1] ss:$2 sm:$0xff] %v385
        %s390 = scalar_lea.vmem [#allocation1], 16
        %391 = vst [vmem:[%s390] ss:$2 sm:$0xff] %v386
        %v392 = vld.sshfl [vmem:[#allocation1] sm:$0xff pattern:$0x75316420]
        %v393 = vld.sshfl [vmem:[#allocation1 + $0x8] sm:$0xff pattern:$0x75316420]
        %v394 = vld.sshfl [vmem:[#allocation1 + $0x10] sm:$0xff pattern:$0x75316420]
        %395 = vrot.lane.b32.xlu0 %v392, 92
        %v396 = vpop.permute.xlu0 %395
        %397 = vrot.lane.b32.xlu0 %v393, 92
        %v398 = vpop.permute.xlu0 %397
        %399 = vrot.lane.b32.xlu0 %v394, 92
        %v400 = vpop.permute.xlu0 %399
        %vm401 = vcmask 752640
        %v402 = vsel %vm401, %v396, %v398
        %v403 = vsel %vm401, %v398, %v400
        %407 = vst [vmem:[#allocation2 + $0x48] sm:$0xf] %v402
        %408 = vst [vmem:[#allocation2 + $0x50] sm:$0xf] %v403
        %409 = vst.msk [vmem:[#allocation2 + $0x58] sm:$0xf] %vm254, %v400
        %v410 = vld [vmem:[%s197] sm:$0xff]
        %v411 = vld [vmem:[%s197 + $0x8] sm:$0xf]
        %s414 = scalar_lea.vmem [#allocation1], 1
        %415 = vst [vmem:[%s414] ss:$2 sm:$0xff] %v410
        %s416 = scalar_lea.vmem [#allocation1], 17
        %417 = vst [vmem:[%s416] ss:$2 sm:$0xff] %v411
        %v418 = vld.sshfl [vmem:[#allocation1] sm:$0xff pattern:$0x75316420]
        %v419 = vld.sshfl [vmem:[#allocation1 + $0x8] sm:$0xff pattern:$0x75316420]
        %v420 = vld.sshfl [vmem:[#allocation1 + $0x10] sm:$0xff pattern:$0x75316420]
        %421 = vrot.lane.b32.xlu0 %v418, 91
        %v422 = vpop.permute.xlu0 %421
        %423 = vrot.lane.b32.xlu0 %v419, 91
        %v424 = vpop.permute.xlu0 %423
        %425 = vrot.lane.b32.xlu0 %v420, 91
        %v426 = vpop.permute.xlu0 %425
        %vm427 = vcmask 744448
        %v428 = vsel %vm427, %v422, %v424
        %v429 = vsel %vm427, %v424, %v426
        %433 = vst [vmem:[#allocation2 + $0x48] sm:$0xf0] %v428
        %434 = vst [vmem:[#allocation2 + $0x50] sm:$0xf0] %v429
        %435 = vst.msk [vmem:[#allocation2 + $0x58] sm:$0xf0] %vm281, %v426
        %v436 = vld [vmem:[%s197] sm:$0xff]
        %v437 = vld [vmem:[%s197 + $0x8] sm:$0xf]
        %440 = vst [vmem:[#allocation1] ss:$2 sm:$0xff] %v436
        %s441 = scalar_lea.vmem [#allocation1], 16
        %442 = vst [vmem:[%s441] ss:$2 sm:$0xff] %v437
        %v443 = vld.sshfl [vmem:[#allocation1] sm:$0xff pattern:$0x75316420]
        %v444 = vld.sshfl [vmem:[#allocation1 + $0x8] sm:$0xff pattern:$0x75316420]
        %v445 = vld.sshfl [vmem:[#allocation1 + $0x10] sm:$0xff pattern:$0x75316420]
        %446 = vrot.lane.b32.xlu0 %v443, 90
        %v447 = vpop.permute.xlu0 %446
        %448 = vrot.lane.b32.xlu0 %v444, 90
        %v449 = vpop.permute.xlu0 %448
        %450 = vrot.lane.b32.xlu0 %v445, 90
        %v451 = vpop.permute.xlu0 %450
        %vm452 = vcmask 736256
        %v453 = vsel %vm452, %v447, %v449
        %v454 = vsel %vm452, %v449, %v451
        %458 = vst [vmem:[#allocation2 + $0x60] sm:$0xf] %v453
        %459 = vst [vmem:[#allocation2 + $0x68] sm:$0xf] %v454
        %460 = vst.msk [vmem:[#allocation2 + $0x70] sm:$0xf] %vm254, %v451
        %v461 = vld [vmem:[#allocation2] sm:$0xff]
        %v462 = vld [vmem:[#allocation2 + $0x8] sm:$0xff]
        %v463 = vld [vmem:[#allocation2 + $0x10] sm:$0xff]
        %v464 = vld [vmem:[#allocation2 + $0x18] sm:$0xff]
        %v465 = vld [vmem:[#allocation2 + $0x20] sm:$0xff]
        %v466 = vld [vmem:[#allocation2 + $0x28] sm:$0xff]
        %v467 = vld [vmem:[#allocation2 + $0x30] sm:$0xff]
        %v468 = vld [vmem:[#allocation2 + $0x38] sm:$0xff]
        %v469 = vld [vmem:[#allocation2 + $0x40] sm:$0xff]
        %v470 = vld [vmem:[#allocation2 + $0x48] sm:$0xff]
        %v471 = vld [vmem:[#allocation2 + $0x50] sm:$0xff]
        %v472 = vld [vmem:[#allocation2 + $0x58] sm:$0xff]
        %v473 = vld [vmem:[#allocation2 + $0x60] sm:$0xf]
        %v474 = vld [vmem:[#allocation2 + $0x68] sm:$0xf]
        %v475 = vld [vmem:[#allocation2 + $0x70] sm:$0xf]
        %477 = vset.pattern.permute.xlu0 0
        %478 = vperm.xlu0 %477, %v238
        %v479 = vpop.permute.xlu0 %478
        %vm481 = vcmask 293888
        %v483 = vsel %vm481, %v237, 0
        %vm485 = vcmask 1043456
        %v487 = vsel %vm485, %v473, 0
        %v490 = vsel %vm485, %v474, 0
        %v493 = vsel %vm485, %v475, 0
        %495 = vmatpush.msra.mxu0 0.0
        %496 = vmatpush.msra.mxu0 0.0
        %497 = vmatpush.msra.mxu0 0.0
        %498 = vmatpush.msra.mxu0 0.0
        %499 = vmatpush.msra.mxu0 0.0
        %500 = vmatpush.msra.mxu0 0.0
        %501 = vmatpush.msra.mxu0 0.0
        %502 = vmatpush.msra.mxu0 0.0
        %503 = vmatpush.msra.mxu0 0.0
        %504 = vmatpush.msra.mxu0 0.0
        %505 = vmatpush.msra.mxu0 0.0
        %506 = vmatpush.msra.mxu0 %v487
        %507 = vmatpush.msra.mxu0 %v470
        %508 = vmatpush.msra.mxu0 %v467
        %509 = vmatpush.msra.mxu0 %v464
        %510 = vmatpush.msra.mxu0 %v461
        %511 = vmatmul.f32.gmra.mxu0 %v483
        %v512 = vpop.f32.mrf.mxu0
        %v513 = vadd.f32 %v479, %v512
        %514 = vdwg.mxu0
        %515 = vmatpush.msra.mxu0 0.0
        %516 = vmatpush.msra.mxu0 0.0
        %517 = vmatpush.msra.mxu0 0.0
        %518 = vmatpush.msra.mxu0 0.0
        %519 = vmatpush.msra.mxu0 0.0
        %520 = vmatpush.msra.mxu0 0.0
        %521 = vmatpush.msra.mxu0 0.0
        %522 = vmatpush.msra.mxu0 0.0
        %523 = vmatpush.msra.mxu0 0.0
        %524 = vmatpush.msra.mxu0 0.0
        %525 = vmatpush.msra.mxu0 0.0
        %526 = vmatpush.msra.mxu0 %v490
        %527 = vmatpush.msra.mxu0 %v471
        %528 = vmatpush.msra.mxu0 %v468
        %529 = vmatpush.msra.mxu0 %v465
        %530 = vmatpush.msra.mxu0 %v462
        %531 = vmatmul.f32.gmra.mxu0 %v483
        %v532 = vpop.f32.mrf.mxu0
        %v533 = vadd.f32 %v479, %v532
        %534 = vdwg.mxu0
        %535 = vmatpush.msra.mxu0 0.0
        %536 = vmatpush.msra.mxu0 0.0
        %537 = vmatpush.msra.mxu0 0.0
        %538 = vmatpush.msra.mxu0 0.0
        %539 = vmatpush.msra.mxu0 0.0
        %540 = vmatpush.msra.mxu0 0.0
        %541 = vmatpush.msra.mxu0 0.0
        %542 = vmatpush.msra.mxu0 0.0
        %543 = vmatpush.msra.mxu0 0.0
        %544 = vmatpush.msra.mxu0 0.0
        %545 = vmatpush.msra.mxu0 0.0
        %546 = vmatpush.msra.mxu0 %v493
        %547 = vmatpush.msra.mxu0 %v472
        %548 = vmatpush.msra.mxu0 %v469
        %549 = vmatpush.msra.mxu0 %v466
        %550 = vmatpush.msra.mxu0 %v463
        %551 = vmatmul.f32.gmra.mxu0 %v483
        %v552 = vpop.f32.mrf.mxu0
        %v553 = vadd.f32 %v479, %v552
        %554 = vdwg.mxu0
        %v555 = vmul.f32 %v513, 0.5
        %v556 = vmul.f32 %v533, 0.5
        %v557 = vmul.f32 %v553, 0.5
        %v558 = vmul.f32 %v513, 0.70710677
        %v559 = vmul.f32 %v533, 0.70710677
        %v560 = vmul.f32 %v553, 0.70710677
        %v561 = vmul.f32 %v558, %v558
        %v562 = vmin.f32 16.0, %v561
        %v563 = vmul.f32 %v562, 2.1237322e-06
        %v564 = vadd.f32 %v563, 0.00028619796
        %v565 = vmul.f32 %v562, %v564
        %v566 = vadd.f32 %v565, 0.0036580483
        %v567 = vmul.f32 %v562, %v566
        %v568 = vadd.f32 %v567, 0.05243302
        %v569 = vmul.f32 %v562, %v568
        %v570 = vadd.f32 %v569, 0.18741608
        %v571 = vmul.f32 %v562, %v570
        %v572 = vadd.f32 %v571, 1.1283791
        %v573 = vmul.f32 %v558, %v572
        %v574 = vmul.f32 %v562, 3.8918573e-05
        %v575 = vadd.f32 %v574, 0.001143296
        %v576 = vmul.f32 %v562, %v575
        %v577 = vadd.f32 %v576, 0.014752088
        %v578 = vmul.f32 %v562, %v577
        %v579 = vadd.f32 %v578, 0.112945676
        %v580 = vmul.f32 %v562, %v579
        %v581 = vadd.f32 %v580, 0.4994258
        %v582 = vmul.f32 %v562, %v581
        %v583 = vadd.f32 %v582, 1.0
        %v584 = vrcp.pop %v583
        %v585 = vmul.f32 %v583, %v584
        %v586 = vsub.f32 1.0, %v585
        %v587 = vmul.f32 %v584, %v586
        %v588 = vadd.f32 %v584, %v587
        %vm589 = vweird.f32 %v583
        %vm590 = vweird.f32 %v584
        %vm591 = vmor %vm589, %vm590
        %v592 = vsel %vm591, %v584, %v588
        %v593 = vand.u32 2147483647, %v583
        %vm594 = vcmp.eq.f32.partialorder %v593, 8.507059e+37
        %v595 = vand.u32 %v583, 2147483648
        %v596 = vor.u32 1.1754944e-38, %v595
        %v597 = vsel %vm594, %v596, %v592
        %v598 = vmul.f32 %v573, %v597
        %v599 = vmin.f32 %v598, 1.0
        %v600 = vmax.f32 %v599, -1.0
        %v601 = vmul.f32 %v559, %v559
        %v602 = vmin.f32 16.0, %v601
        %v603 = vmul.f32 %v602, 2.1237322e-06
        %v604 = vadd.f32 %v603, 0.00028619796
        %v605 = vmul.f32 %v602, %v604
        %v606 = vadd.f32 %v605, 0.0036580483
        %v607 = vmul.f32 %v602, %v606
        %v608 = vadd.f32 %v607, 0.05243302
        %v609 = vmul.f32 %v602, %v608
        %v610 = vadd.f32 %v609, 0.18741608
        %v611 = vmul.f32 %v602, %v610
        %v612 = vadd.f32 %v611, 1.1283791
        %v613 = vmul.f32 %v559, %v612
        %v614 = vmul.f32 %v602, 3.8918573e-05
        %v615 = vadd.f32 %v614, 0.001143296
        %v616 = vmul.f32 %v602, %v615
        %v617 = vadd.f32 %v616, 0.014752088
        %v618 = vmul.f32 %v602, %v617
        %v619 = vadd.f32 %v618, 0.112945676
        %v620 = vmul.f32 %v602, %v619
        %v621 = vadd.f32 %v620, 0.4994258
        %v622 = vmul.f32 %v602, %v621
        %v623 = vadd.f32 %v622, 1.0
        %v624 = vrcp.pop %v623
        %v625 = vmul.f32 %v623, %v624
        %v626 = vsub.f32 1.0, %v625
        %v627 = vmul.f32 %v624, %v626
        %v628 = vadd.f32 %v624, %v627
        %vm629 = vweird.f32 %v623
        %vm630 = vweird.f32 %v624
        %vm631 = vmor %vm629, %vm630
        %v632 = vsel %vm631, %v624, %v628
        %v633 = vand.u32 2147483647, %v623
        %vm634 = vcmp.eq.f32.partialorder %v633, 8.507059e+37
        %v635 = vand.u32 %v623, 2147483648
        %v636 = vor.u32 1.1754944e-38, %v635
        %v637 = vsel %vm634, %v636, %v632
        %v638 = vmul.f32 %v613, %v637
        %v639 = vmin.f32 %v638, 1.0
        %v640 = vmax.f32 %v639, -1.0
        %v641 = vmul.f32 %v560, %v560
        %v642 = vmin.f32 16.0, %v641
        %v643 = vmul.f32 %v642, 2.1237322e-06
        %v644 = vadd.f32 %v643, 0.00028619796
        %v645 = vmul.f32 %v642, %v644
        %v646 = vadd.f32 %v645, 0.0036580483
        %v647 = vmul.f32 %v642, %v646
        %v648 = vadd.f32 %v647, 0.05243302
        %v649 = vmul.f32 %v642, %v648
        %v650 = vadd.f32 %v649, 0.18741608
        %v651 = vmul.f32 %v642, %v650
        %v652 = vadd.f32 %v651, 1.1283791
        %v653 = vmul.f32 %v560, %v652
        %v654 = vmul.f32 %v642, 3.8918573e-05
        %v655 = vadd.f32 %v654, 0.001143296
        %v656 = vmul.f32 %v642, %v655
        %v657 = vadd.f32 %v656, 0.014752088
        %v658 = vmul.f32 %v642, %v657
        %v659 = vadd.f32 %v658, 0.112945676
        %v660 = vmul.f32 %v642, %v659
        %v661 = vadd.f32 %v660, 0.4994258
        %v662 = vmul.f32 %v642, %v661
        %v663 = vadd.f32 %v662, 1.0
        %v664 = vrcp.pop %v663
        %v665 = vmul.f32 %v663, %v664
        %v666 = vsub.f32 1.0, %v665
        %v667 = vmul.f32 %v664, %v666
        %v668 = vadd.f32 %v664, %v667
        %vm669 = vweird.f32 %v663
        %vm670 = vweird.f32 %v664
        %vm671 = vmor %vm669, %vm670
        %v672 = vsel %vm671, %v664, %v668
        %v673 = vand.u32 2147483647, %v663
        %vm674 = vcmp.eq.f32.partialorder %v673, 8.507059e+37
        %v675 = vand.u32 %v663, 2147483648
        %v676 = vor.u32 1.1754944e-38, %v675
        %v677 = vsel %vm674, %v676, %v672
        %v678 = vmul.f32 %v653, %v677
        %v679 = vmin.f32 %v678, 1.0
        %v680 = vmax.f32 %v679, -1.0
        %v681 = vadd.f32 %v600, 1.0
        %v682 = vadd.f32 %v640, 1.0
        %v683 = vadd.f32 %v680, 1.0
        %v684 = vmul.f32 %v555, %v681
        %v685 = vmul.f32 %v556, %v682
        %v686 = vmul.f32 %v557, %v683
        %687 = vst [vmem:[%s228] sm:$0xff] %v684
        %688 = vst [vmem:[%s228 + $0x8] sm:$0xff] %v685
        %vm689 = vcmask 261120
        %690 = vst.msk [vmem:[%s228 + $0x10] sm:$0xff] %vm689, %v686
        %s691 = sand.u32 %s120, 1
        %s692 = scalar_lea.sflag [#allocation5], %s691
        %s693 = sand.u32 %s120, 1
        %s694 = smul.addr %s693, 24
        %s695 = scalar_lea.vmem [#allocation6], %s694
        // Predicated region
        $region37: #{tpu_custom_call.1} parent=31 // pred_check
          %p696 = pneg %p130
        $region38: #{tpu_custom_call.1} parent=31 // pred_check_branch
          %698 = sbr.rel (%p696) target = $region40
        $region39: #{tpu_custom_call.1} parent=31 // pred_region
          %700 = vsyncadd %s692, 0
          %s701 = smul.addr %s25, 3
          %s702 = smul.addr %s24, 3
          %s703 = sadd.s32 %s701, %s702
          %s704 = smul.addr %s703, 8
          %s705 = scalar_lea.hbm %s3, %s704
          %s707 = sshll.u32 %s695, 4
          %s708 = int_to_ptr.vmem [resolvable:$true] %s707
          %s709 = sshll.u32 %s705, 4
          %s710 = int_to_ptr.hbm [resolvable:$true] %s709
          %712 = dma.vmem_to_hbm [thread:$0]  %s708, 384, %s710, %s692
        $region40: #{tpu_custom_call.1} parent=31 // pred_fallthru
          _
      $region32: #{tpu_custom_call.1} parent=5 // pred_fallthru
        _
      %p713 = scmp.le.s32.totalorder 2, %s15
      // Predicated region
      $region41: #{tpu_custom_call.1} parent=5 // pred_check
        %p714 = pneg %p713
      $region42: #{tpu_custom_call.1} parent=5 // pred_check_branch
        %716 = sbr.rel (%p714) target = $region44
      $region43: #{tpu_custom_call.1} parent=5 // pred_region
        %s717 = ssub.s32 %s15, 2
        // Predicated region
        $region45: #{tpu_custom_call.1} parent=43 // pred_check
          %p718 = pneg %p136
        $region46: #{tpu_custom_call.1} parent=43 // pred_check_branch
          %720 = sbr.rel (%p718) target = $region48
        $region47: #{tpu_custom_call.1} parent=43 // pred_region
          %s721 = sand.u32 %s121, 1
          %s722 = scalar_lea.sflag [#allocation5], %s721
          %s723 = sand.u32 %s121, 1
          %s724 = smul.addr %s723, 24
          %s725 = scalar_lea.vmem [#allocation6], %s724
          %727 = dma.done %s722, 384
        $region48: #{tpu_custom_call.1} parent=43 // pred_fallthru
          _
      $region44: #{tpu_custom_call.1} parent=5 // pred_fallthru
        _
    $region6: #{tpu_custom_call.1} parent=1 // loop_footer
      %s19 = sadd.s32 1, %s15
    $region7: #{tpu_custom_call.1} parent=1 // loop_footer_branch
      %14 = sbr.rel target = $region3
    $region8: #{tpu_custom_call.1} parent=1 // loop_exit
      _
    %728 = vsyncpa [#allocation4], 1
    %s729 = scalar_lea.sflag [#allocation4], 1
    %730 = vsyncpa %s729, 1
    %731 = vsyncpa [#allocation5], 1
    %s732 = scalar_lea.sflag [#allocation5], 1
    %733 = vsyncpa %s732, 1

</llo_original>
